<compile_context>
chip_gen: v6e
topology: v6e:2x2x1
jax: 0.10.0
libtpu: 0.0.40
codegen_flags: <defaults>
</compile_context>

<pallas_src>
import jax
import jax.numpy as jnp
from jax.experimental import pallas as pl
from jax.experimental.pallas import tpu as pltpu


def _composite_kernel(x_ref, sb_ref, y_ref):
    # x_ref : (br, bc) tile of the flattened (B*C, H*W) input
    # sb_ref: (br, 2)  fused f32 side-band — col 0 = folded scale, col 1 = shift
    sb = sb_ref[...]
    s = sb[:, 0:1]                      # (br, 1), broadcast along lanes
    b = sb[:, 1:2]                      # (br, 1)
    y_ref[...] = (x_ref[...].astype(jnp.float32) * s + b).astype(y_ref.dtype)


def _round_up(n, m):
    return (n + m - 1) // m * m


def _sublane_multiple(dtype):
    # Native sublane packing: 8 rows for 32-bit, 16 for 16-bit, 32 for 8-bit.
    return max(8, 32 // jnp.dtype(dtype).itemsize)


def _vmem_target_bytes():
    """Per-generation streaming-block byte budget."""
    try:
        vmem = getattr(pltpu.get_tpu_info(), "vmem_capacity_bytes", 0) or 0
    except Exception:
        vmem = 0
    if vmem and vmem <= 64 * 1024 * 1024:
        # v7x: ~3.2 TB/s HBM -> bigger blocks amortize per-step cost; the
        # double-buffered in+out footprint (~4x block) stays << 64 MiB.
        return 4 * 1024 * 1024
    # v5e / v6e / unknown: 2 MiB blocks already sit near the HBM roofline and
    # the ~8 MiB footprint fits every default scoped-VMEM budget.
    return 2 * 1024 * 1024


def _choose_block(rows, cols, dtype, target_bytes):
    """rows/cols are already padded to (sublane, 128) alignment (or sub-tile)."""
    sub = _sublane_multiple(dtype)
    itemsize = jnp.dtype(dtype).itemsize
    target_elems = max(1, target_bytes // itemsize)

    # Preferred: full-lane-extent blocks -> contiguous HBM DMAs, lane-dense
    # stores, 1-D grid over row groups.
    br = (target_elems // cols) // sub * sub
    if br >= sub or rows <= sub:
        br = min(rows, max(br, sub))
        # Megacore / v7x dual-TC: keep >= 2 row blocks when possible so the
        # "parallel" grid axis can shard across both TensorCores.
        if br >= rows and rows >= 2 * sub:
            br = _round_up(rows // 2, sub)
        return br, cols

    # Fallback (cols too wide for even one `sub`-row slab): tile the lane axis
    # from the byte budget — no hard lane cap, still a multiple of 128.
    bc = (target_elems // sub) // 128 * 128
    bc = max(128, min(cols, bc))
    return min(rows, sub), bc


def composite_forward(x, log_scales, biases, *, force_pallas=False):
    """x: (B, C, H, W).  Returns (y: (B, C, H, W), logdet: (B,)).

    Matches Composite.forward over T per-channel affine child transforms.
    """
    B, C, H, W = x.shape
    HW = H * W
    T = log_scales.shape[0]

    # --- Fold the whole chain into one per-channel affine (O(T*C) flops).
    logs32 = log_scales.astype(jnp.float32)
    bias32 = biases.astype(jnp.float32)
    cum_s = jnp.ones((C,), jnp.float32)
    cum_b = jnp.zeros((C,), jnp.float32)
    for t in range(T):
        s_t = jnp.exp(logs32[t])
        cum_s = cum_s * s_t
        cum_b = cum_b * s_t + bias32[t]

    # --- logdet is data-independent: same scalar replicated per sample.
    logdet = jnp.full((B,), HW * jnp.sum(logs32), dtype=jnp.float32)

    rows = B * C
    itemsize = jnp.dtype(x.dtype).itemsize

    # --- Small-problem bypass: below ~1 MiB the pallas_call launch/setup cost
    # dominates on every generation; a fused XLA elementwise is cheaper.
    if rows * HW * itemsize < (1 << 20) and not force_pallas:
        y = (x.astype(jnp.float32) * cum_s.reshape(1, C, 1, 1)
             + cum_b.reshape(1, C, 1, 1)).astype(x.dtype)
        return y, logdet

    # --- Lane-dense 2-D layout: rows = B*C (sublanes), cols = HW (lanes).
    x2 = x.reshape(rows, HW)
    sub = _sublane_multiple(x.dtype)
    rows_p = rows if rows <= sub else _round_up(rows, sub)
    cols_p = HW if HW <= 128 else _round_up(HW, 128)
    if (rows_p, cols_p) != (rows, HW):
        x2 = jnp.pad(x2, ((0, rows_p - rows), (0, cols_p - HW)))

    # Fused f32 side-band: one (rows_p, 2) array instead of two (rows, 1).
    row_s = jnp.tile(cum_s, B)
    row_b = jnp.tile(cum_b, B)
    if rows_p != rows:
        row_s = jnp.pad(row_s, (0, rows_p - rows), constant_values=1.0)
        row_b = jnp.pad(row_b, (0, rows_p - rows))
    sideband = jnp.stack([row_s, row_b], axis=-1)        # (rows_p, 2) f32

    br, bc = _choose_block(rows_p, cols_p, x.dtype, _vmem_target_bytes())

    if bc == cols_p:
        # Full-lane-extent blocks -> contiguous DMAs, 1-D grid over rows.
        grid = (pl.cdiv(rows_p, br),)
        in_specs = [pl.BlockSpec((br, bc), lambda i: (i, 0)),
                    pl.BlockSpec((br, 2), lambda i: (i, 0))]
        out_spec = pl.BlockSpec((br, bc), lambda i: (i, 0))
        dims = ("parallel",)
    else:
        grid = (pl.cdiv(rows_p, br), pl.cdiv(cols_p, bc))
        in_specs = [pl.BlockSpec((br, bc), lambda i, j: (i, j)),
                    pl.BlockSpec((br, 2), lambda i, j: (i, 0))]
        out_spec = pl.BlockSpec((br, bc), lambda i, j: (i, j))
        dims = ("parallel", "parallel")

    y2 = pl.pallas_call(
        _composite_kernel,
        out_shape=jax.ShapeDtypeStruct((rows_p, cols_p), x.dtype),
        grid=grid,
        in_specs=in_specs,
        out_specs=out_spec,
        compiler_params=pltpu.CompilerParams(
            dimension_semantics=dims,
            vmem_limit_bytes=32 * 1024 * 1024),
    )(x2, sideband)

    if (rows_p, cols_p) != (rows, HW):
        y2 = y2[:rows, :HW]
    return y2.reshape(B, C, H, W), logdet


def composite_reference(x, log_scales, biases):
    """Plain-JAX mirror of Composite.forward over the same affine transforms."""
    B, _, H, W = x.shape
    y = x.astype(jnp.float32)
    logdet = jnp.zeros((B,), jnp.float32)
    for t in range(log_scales.shape[0]):
        s = log_scales[t].reshape(1, -1, 1, 1)
        b = biases[t].reshape(1, -1, 1, 1)
        y = y * jnp.exp(s) + b
        logdet = logdet + H * W * jnp.sum(log_scales[t])
    return y.astype(x.dtype), logdet


if __name__ == "__main__":
    B, C, H, W = 2, 4, 16, 16
    T = 3  # number of transforms in the Composite

    key = jax.random.PRNGKey(0)
    x = jax.random.normal(key, (B, C, H, W), dtype=jnp.float32)

    # Deterministic synthetic parameters for the T child affine transforms.
    log_scales = (0.05 * jnp.arange(T * C, dtype=jnp.float32).reshape(T, C)
                  - 0.15)
    biases = 0.1 * jnp.arange(T * C, dtype=jnp.float32).reshape(T, C) - 0.3

    # Force the Pallas path (the default would take the small-problem bypass
    # for this sub-VMEM test shape).
    y, logdet = composite_forward(x, log_scales, biases, force_pallas=True)
    y = jax.block_until_ready(y)
    logdet = jax.block_until_ready(logdet)

    y_ref, ld_ref = composite_reference(x, log_scales, biases)
    assert jnp.allclose(y, y_ref, atol=1e-5, rtol=1e-5), "output mismatch"
    assert jnp.allclose(logdet, ld_ref, atol=1e-4, rtol=1e-5), "logdet mismatch"

    # Also validate the small-problem bypass path.
    y_b, ld_b = composite_forward(x, log_scales, biases)
    y_b = jax.block_until_ready(y_b)
    assert jnp.allclose(y_b, y_ref, atol=1e-5, rtol=1e-5), "bypass output mismatch"
    assert jnp.allclose(ld_b, ld_ref, atol=1e-4, rtol=1e-5), "bypass logdet mismatch"

    print("KERNEL_OK")
</pallas_src>

<mosaic_0001>
module attributes {stable_mosaic.version = 11 : i64} {
  func.func @_composite_kernel(%arg0: i32, %arg1: memref<8x256xf32, #tpu.memory_space<vmem>>, %arg2: memref<8x2xf32, #tpu.memory_space<vmem>>, %arg3: memref<8x256xf32, #tpu.memory_space<vmem>>) attributes {dimension_semantics = [#tpu.dimension_semantics<parallel>], iteration_bounds = array<i64: 1>, scalar_prefetch = 0 : i64, scratch_operands = 0 : i64, tpu.core_type = #tpu.core_type<tc>, window_params = [{transform_indices = @transform_0, window_bounds = array<i64: 8, 256>}, {transform_indices = @transform_1, window_bounds = array<i64: 8, 2>}, {transform_indices = @transform_2, window_bounds = array<i64: 8, 256>}]} {
    %c0 = arith.constant 0 : index
    %c0_0 = arith.constant 0 : index
    %0 = vector.load %arg2[%c0, %c0_0] : memref<8x2xf32, #tpu.memory_space<vmem>>, vector<8x2xf32>
    %1 = vector.extract_strided_slice %0 {offsets = [0, 0], sizes = [8, 1], strides = [1, 1]} : vector<8x2xf32> to vector<8x1xf32>
    %2 = vector.extract_strided_slice %0 {offsets = [0, 1], sizes = [8, 1], strides = [1, 1]} : vector<8x2xf32> to vector<8x1xf32>
    %c0_1 = arith.constant 0 : index
    %c0_2 = arith.constant 0 : index
    %3 = vector.load %arg1[%c0_1, %c0_2] : memref<8x256xf32, #tpu.memory_space<vmem>>, vector<8x256xf32>
    %4 = vector.broadcast %1 : vector<8x1xf32> to vector<8x256xf32>
    %5 = arith.mulf %3, %4 : vector<8x256xf32>
    %6 = vector.broadcast %2 : vector<8x1xf32> to vector<8x256xf32>
    %7 = arith.addf %5, %6 : vector<8x256xf32>
    %c0_3 = arith.constant 0 : index
    %c0_4 = arith.constant 0 : index
    %8 = vector.load %arg3[%c0_3, %c0_4] : memref<8x256xf32, #tpu.memory_space<vmem>>, vector<8x256xf32>
    tpu.vector_store %arg3[%c0_3, %c0_4], %7 {strides = array<i32>} : memref<8x256xf32, #tpu.memory_space<vmem>>, vector<8x256xf32>,
    return
  }
  func.func @transform_0(%arg0: i32) -> (i32, i32) {
    %c0_i32 = arith.constant 0 : i32
    %c0_i32_0 = arith.constant 0 : i32
    return %arg0, %c0_i32 : i32, i32
  }
  func.func @transform_1(%arg0: i32) -> (i32, i32) {
    %c0_i32 = arith.constant 0 : i32
    %c0_i32_0 = arith.constant 0 : i32
    return %arg0, %c0_i32 : i32, i32
  }
  func.func @transform_2(%arg0: i32) -> (i32, i32) {
    %c0_i32 = arith.constant 0 : i32
    %c0_i32_0 = arith.constant 0 : i32
    return %arg0, %c0_i32 : i32, i32
  }
}

</mosaic_0001>

<llo_original>
// kernel: tpu_custom_call.1
$region0: #{tpu_custom_call.1}
  #allocation0 [shape = 'u32[]', space=smem, size = 0x4, offset = 0x4, fixed_abs, tag = 'smem constant byte address 0x4 - core index']
  #allocation1 [shape = 'u32[144,128]{1,0:T(1,128)}', space=vmem, size = 0x12000, scoped, tag = 'internal scratch']
  %s0 = inlined_call_operand.hbm [shape: f32[8,256], index: 0, kind: input, shape index: {}]
  %s1 = inlined_call_operand.vmem [shape: f32[8,2], index: 1, kind: input, shape index: {}]
  %s2 = inlined_call_operand.hbm [shape: f32[8,256], index: 2, kind: output, shape index: {}]
  %s3 = sld [smem:[#allocation0]]
  $region22: #{tpu_custom_call.1} parent=0
    _
  %s5 = ssub.s32 1, %s3
  %s6 = scalar_select 0, %s5, %s3
  $region1: #{tpu_custom_call.1} parent=0
    #allocation2 [shape = 'u8[8192]{0}', space=vmem, size = 0x2000, scoped, tag = 'input window, operand 0, single buffered']
    #allocation3 [shape = 's32[1]{0}', space=sflag, size = 0x4, scoped, tag = 'scoped memory for tpu_custom_call.1']
    #allocation4 [shape = 's32[1]{0}', space=sflag, size = 0x4, scoped, tag = 'scoped memory for tpu_custom_call.1']
    #allocation5 [shape = 'u8[8192]{0}', space=vmem, size = 0x2000, scoped, tag = 'output window, operand 0, single buffered']
    %7 = vsyncpa [#allocation3], 0
    %8 = vsyncpa [#allocation4], 0
    // Predicated region
    $region2: #{tpu_custom_call.1} parent=1 // pred_check
      _
    $region3: #{tpu_custom_call.1} parent=1 // pred_check_branch
      %10 = sbr.rel (0) target = $region5
    $region4: #{tpu_custom_call.1} parent=1 // pred_region
      %s12 = ssub.s32 256, 256
      %13 = vsyncadd [#allocation3], %s12
      %s15 = sshll.u32 [#allocation2], 4
      %s16 = int_to_ptr.vmem [resolvable:$true] %s15
      %18 = dma.hbm_to_vmem [thread:$0]  %s0, 256, %s16, [#allocation3]
    $region5: #{tpu_custom_call.1} parent=1 // pred_fallthru
      _
    // Predicated region
    $region6: #{tpu_custom_call.1} parent=1 // pred_check
      _
    $region7: #{tpu_custom_call.1} parent=1 // pred_check_branch
      %20 = sbr.rel (0) target = $region9
    $region8: #{tpu_custom_call.1} parent=1 // pred_region
      _
    $region9: #{tpu_custom_call.1} parent=1 // pred_fallthru
      _
    // Predicated region
    $region10: #{tpu_custom_call.1} parent=1 // pred_check
      _
    $region11: #{tpu_custom_call.1} parent=1 // pred_check_branch
      %22 = sbr.rel (0) target = $region13
    $region12: #{tpu_custom_call.1} parent=1 // pred_region
      %23 = dma.done [#allocation3], 256
    $region13: #{tpu_custom_call.1} parent=1 // pred_fallthru
      _
    %v24 = vld [vmem:[%s1] sm:$0xff]
    %v25 = vld [vmem:[#allocation2] sm:$0xff]
    %v26 = vld [vmem:[#allocation2 + $0x8] sm:$0xff]
    %28 = vset.pattern.permute.xlu0 0
    %29 = vperm.xlu0 %28, %v24
    %v30 = vpop.permute.xlu0 %29
    %v32 = vmul.f32 %v25, %v30
    %v33 = vmul.f32 %v26, %v30
    %34 = vset.pattern.permute.xlu0 1
    %35 = vperm.xlu0 %34, %v24
    %v36 = vpop.permute.xlu0 %35
    %v38 = vadd.f32 %v32, %v36
    %v39 = vadd.f32 %v33, %v36
    %40 = vst [vmem:[#allocation5] sm:$0xff] %v38
    %41 = vst [vmem:[#allocation5 + $0x8] sm:$0xff] %v39
    // Predicated region
    $region14: #{tpu_custom_call.1} parent=1 // pred_check
      _
    $region15: #{tpu_custom_call.1} parent=1 // pred_check_branch
      %43 = sbr.rel (0) target = $region17
    $region16: #{tpu_custom_call.1} parent=1 // pred_region
      %s45 = ssub.s32 256, 256
      %46 = vsyncadd [#allocation4], %s45
      %s48 = sshll.u32 [#allocation5], 4
      %s49 = int_to_ptr.vmem [resolvable:$true] %s48
      %51 = dma.vmem_to_hbm [thread:$0]  %s49, 256, %s2, [#allocation4]
    $region17: #{tpu_custom_call.1} parent=1 // pred_fallthru
      _
    // Predicated region
    $region18: #{tpu_custom_call.1} parent=1 // pred_check
      _
    $region19: #{tpu_custom_call.1} parent=1 // pred_check_branch
      %53 = sbr.rel (0) target = $region21
    $region20: #{tpu_custom_call.1} parent=1 // pred_region
      %54 = dma.done [#allocation4], 256
    $region21: #{tpu_custom_call.1} parent=1 // pred_fallthru
      _
    %55 = vsyncpa [#allocation3], 1
    %56 = vsyncpa [#allocation4], 1

</llo_original>
